<compile_context>
chip_gen: v6e
topology: v6e:2x2x1
jax: 0.10.0
libtpu: 0.0.40
codegen_flags: <defaults>
</compile_context>

<pallas_src>
import jax
import jax.numpy as jnp
from jax.experimental import pallas as pl
from jax.experimental.pallas import tpu as pltpu

LANE = 128      # lane width (last-dim alignment for lane-dense stores)
SUBLANE = 8     # sublane width (second-to-last-dim alignment)


def _round_up(x: int, m: int) -> int:
    return ((x + m - 1) // m) * m


def mlp_kernel(x_ref, w1_ref, b1_ref, w2_ref, b2_ref, w3_ref, b3_ref, o_ref):
    # fc1 + relu : bf16 operands, f32 accumulation, f32 epilogue.
    h = jnp.dot(x_ref[...], w1_ref[...], preferred_element_type=jnp.float32)
    h = jnp.maximum(h + b1_ref[...], 0.0)
    # fc2 + relu : cast activation back to the weight compute dtype for the MXU.
    h = jnp.dot(h.astype(w2_ref.dtype), w2_ref[...],
                preferred_element_type=jnp.float32)
    h = jnp.maximum(h + b2_ref[...], 0.0)
    # fc3 + tanh
    y = jnp.dot(h.astype(w3_ref.dtype), w3_ref[...],
                preferred_element_type=jnp.float32)
    o_ref[...] = jnp.tanh(y + b3_ref[...]).astype(o_ref.dtype)


def prepare_params(w1, b1, w2, b2, w3, b3, *, compute_dtype=jnp.bfloat16):
    """One-time parameter prep (hoisted out of the forward hot path).

    Inputs use the PyTorch Linear layout: weight (out_features, in_features),
    bias (out_features,).  Returns (in, out)-layout weights cast to
    `compute_dtype`, f32 biases shaped (1, out), with ONLY the final output
    feature dim zero-padded to a multiple of 128 (lane-dense output store).
    """
    out_dim = int(w3.shape[0])
    out_p = _round_up(out_dim, LANE)

    def prep_w(w, pad_cols=None):
        wt = jnp.asarray(w, jnp.float32).T                  # (in, out)
        if pad_cols is not None and pad_cols != wt.shape[1]:
            wt = jnp.pad(wt, ((0, 0), (0, pad_cols - wt.shape[1])))
        return wt.astype(compute_dtype)

    def prep_b(b, pad_cols=None):
        bb = jnp.asarray(b, jnp.float32).reshape(1, -1)     # biases stay f32
        if pad_cols is not None and pad_cols != bb.shape[1]:
            bb = jnp.pad(bb, ((0, 0), (0, pad_cols - bb.shape[1])))
        return bb

    return {
        "w1": prep_w(w1), "b1": prep_b(b1),
        "w2": prep_w(w2), "b2": prep_b(b2),
        "w3": prep_w(w3, out_p), "b3": prep_b(b3, out_p),
        "out_dim": out_dim,
    }


def mlp_forward(x, params, *, block_b: int = 256):
    """Fused MLP forward: tanh(relu(relu(x@w1+b1)@w2+b2)@w3+b3).

    x: (B, input_dim) float32.  params: output of prepare_params().
    Returns (B, output_dim) float32.
    """
    w1, b1 = params["w1"], params["b1"]
    w2, b2 = params["w2"], params["b2"]
    w3, b3 = params["w3"], params["b3"]
    out_dim = params["out_dim"]

    B, in_dim = x.shape
    hid = w1.shape[1]
    out_p = w3.shape[1]

    # Batch tile: multiple of 8, capped at block_b (256 fills the 256-wide MXU
    # on v6e/v7x); pad the batch up to a whole number of tiles.
    tb = min(block_b, _round_up(B, SUBLANE))
    b_p = _round_up(B, tb)

    x_p = x
    if b_p != B:
        x_p = jnp.pad(x_p, ((0, b_p - B), (0, 0)))
    x_p = x_p.astype(w1.dtype)          # bf16 operand; MXU accumulates in f32

    grid = (b_p // tb,)

    # --- VMEM budget (explicit limit; capped at v7x's 64 MiB per-TC VMEM) ----
    def nbytes(a):
        return a.size * a.dtype.itemsize

    weight_bytes = nbytes(w1) + nbytes(w2) + nbytes(w3)
    bias_bytes = nbytes(b1) + nbytes(b2) + nbytes(b3)
    stream_bytes = 2 * (tb * in_dim * x_p.dtype.itemsize + tb * out_p * 4)
    act_bytes = 2 * tb * hid * (4 + w1.dtype.itemsize)      # f32 + bf16 h temps
    # Conservatively assume residents may still be double-buffered (fallback).
    needed = 2 * (weight_bytes + bias_bytes) + stream_bytes + act_bytes
    vmem_limit = int(min(64 * 1024 * 1024,
                         max(needed * 3 // 2 + (2 << 20), 32 << 20)))

    # --- Advisory cost estimate (real, un-inflated dims) ---------------------
    flops = 2 * b_p * (in_dim * hid + hid * hid + hid * out_p)
    bytes_accessed = (nbytes(x_p) + weight_bytes + bias_bytes + b_p * out_p * 4)
    cost = pl.CostEstimate(flops=flops,
                           transcendentals=b_p * out_p,
                           bytes_accessed=bytes_accessed)

    def run(resident_spec):
        in_specs = [
            pl.BlockSpec((tb, in_dim), lambda i: (i, 0)),    # x: tiled on batch
            resident_spec(w1), resident_spec(b1),
            resident_spec(w2), resident_spec(b2),
            resident_spec(w3), resident_spec(b3),
        ]
        return pl.pallas_call(
            mlp_kernel,
            out_shape=jax.ShapeDtypeStruct((b_p, out_p), jnp.float32),
            grid=grid,
            in_specs=in_specs,
            out_specs=pl.BlockSpec((tb, out_p), lambda i: (i, 0)),
            compiler_params=pltpu.CompilerParams(
                dimension_semantics=("parallel",),
                vmem_limit_bytes=vmem_limit),
            cost_estimate=cost,
        )(x_p, w1, b1, w2, b2, w3, b3)

    def resident_single(a):
        # Constant index_map -> block never changes; single buffer suffices.
        return pl.BlockSpec(a.shape, lambda i: (0, 0),
                            pipeline_mode=pl.Buffered(1))

    def resident_default(a):
        return pl.BlockSpec(a.shape, lambda i: (0, 0))

    try:
        out_padded = run(resident_single)
    except Exception:
        # Fallback if this JAX build rejects pipeline_mode on BlockSpec.
        out_padded = run(resident_default)

    return out_padded[:B, :out_dim]


def reference_forward(x, w1, b1, w2, b2, w3, b3):
    """f32 reference with PyTorch-layout weights (out, in)."""
    h = jnp.maximum(x @ w1.T + b1, 0.0)
    h = jnp.maximum(h @ w2.T + b2, 0.0)
    return jnp.tanh(h @ w3.T + b3)


if __name__ == "__main__":
    # Deterministic synthetic parameters (no PPO checkpoint load in-sandbox).
    # TODO(synk): real MyNetwork loads weights from a PPO checkpoint file.
    input_dim, hidden_dim, output_dim = 16, 32, 8
    batch = 8

    key = jax.random.PRNGKey(0)
    keys = jax.random.split(key, 7)

    x = jax.random.normal(keys[0], (batch, input_dim), dtype=jnp.float32)

    # PyTorch Linear layout: weight (out_features, in_features), bias (out,).
    w1 = jax.random.normal(keys[1], (hidden_dim, input_dim), jnp.float32) * 0.2
    b1 = jax.random.normal(keys[2], (hidden_dim,), jnp.float32) * 0.1
    w2 = jax.random.normal(keys[3], (hidden_dim, hidden_dim), jnp.float32) * 0.2
    b2 = jax.random.normal(keys[4], (hidden_dim,), jnp.float32) * 0.1
    w3 = jax.random.normal(keys[5], (output_dim, hidden_dim), jnp.float32) * 0.2
    b3 = jax.random.normal(keys[6], (output_dim,), jnp.float32) * 0.1

    # One-time prep (transpose to (in,out), bf16 cast, output-dim padding).
    params = prepare_params(w1, b1, w2, b2, w3, b3)

    out = mlp_forward(x, params)
    out = jax.block_until_ready(out)

    ref = reference_forward(x, w1, b1, w2, b2, w3, b3)
    assert out.shape == (batch, output_dim)
    # bf16 matmul operands (f32 accumulation) -> relaxed tolerance vs f32 ref.
    assert jnp.allclose(out, ref, atol=2e-2, rtol=2e-2)

    print("KERNEL_OK")
</pallas_src>

<mosaic_0001>
module attributes {stable_mosaic.version = 11 : i64} {
  func.func @mlp_kernel(%arg0: i32, %arg1: memref<8x16xbf16, #tpu.memory_space<vmem>>, %arg2: memref<16x32xbf16, #tpu.memory_space<vmem>>, %arg3: memref<1x32xf32, #tpu.memory_space<vmem>>, %arg4: memref<32x32xbf16, #tpu.memory_space<vmem>>, %arg5: memref<1x32xf32, #tpu.memory_space<vmem>>, %arg6: memref<32x128xbf16, #tpu.memory_space<vmem>>, %arg7: memref<1x128xf32, #tpu.memory_space<vmem>>, %arg8: memref<8x128xf32, #tpu.memory_space<vmem>>) attributes {dimension_semantics = [#tpu.dimension_semantics<parallel>], iteration_bounds = array<i64: 1>, scalar_prefetch = 0 : i64, scratch_operands = 0 : i64, tpu.core_type = #tpu.core_type<tc>, window_params = [{transform_indices = @transform_0, window_bounds = array<i64: 8, 16>}, {pipeline_mode = #tpu.pipeline_mode<synchronous>, transform_indices = @transform_1, window_bounds = array<i64: 16, 32>}, {pipeline_mode = #tpu.pipeline_mode<synchronous>, transform_indices = @transform_2, window_bounds = array<i64: 1, 32>}, {pipeline_mode = #tpu.pipeline_mode<synchronous>, transform_indices = @transform_3, window_bounds = array<i64: 32, 32>}, {pipeline_mode = #tpu.pipeline_mode<synchronous>, transform_indices = @transform_4, window_bounds = array<i64: 1, 32>}, {pipeline_mode = #tpu.pipeline_mode<synchronous>, transform_indices = @transform_5, window_bounds = array<i64: 32, 128>}, {pipeline_mode = #tpu.pipeline_mode<synchronous>, transform_indices = @transform_6, window_bounds = array<i64: 1, 128>}, {transform_indices = @transform_7, window_bounds = array<i64: 8, 128>}]} {
    %c0 = arith.constant 0 : index
    %c0_0 = arith.constant 0 : index
    %0 = vector.load %arg1[%c0, %c0_0] : memref<8x16xbf16, #tpu.memory_space<vmem>>, vector<8x16xbf16>
    %c0_1 = arith.constant 0 : index
    %c0_2 = arith.constant 0 : index
    %1 = vector.load %arg2[%c0_1, %c0_2] : memref<16x32xbf16, #tpu.memory_space<vmem>>, vector<16x32xbf16>
    %cst = arith.constant dense<0.000000e+00> : vector<8x32xf32>
    %2 = tpu.matmul %0, %1, %cst {dimension_numbers = #tpu.dot_dimension_numbers<[1], [0], [0], [1], [0, 0, 1, 1], [], []>} : vector<8x16xbf16>, vector<16x32xbf16>, vector<8x32xf32> -> vector<8x32xf32>
    %c0_3 = arith.constant 0 : index
    %c0_4 = arith.constant 0 : index
    %3 = vector.load %arg3[%c0_3, %c0_4] : memref<1x32xf32, #tpu.memory_space<vmem>>, vector<1x32xf32>
    %4 = vector.broadcast %3 : vector<1x32xf32> to vector<8x32xf32>
    %5 = arith.addf %2, %4 : vector<8x32xf32>
    %cst_5 = arith.constant 0.000000e+00 : f32
    %6 = vector.broadcast %cst_5 : f32 to vector<8x32xf32>
    %7 = arith.maximumf %5, %6 : vector<8x32xf32>
    %8 = arith.truncf %7 : vector<8x32xf32> to vector<8x32xbf16>
    %c0_6 = arith.constant 0 : index
    %c0_7 = arith.constant 0 : index
    %9 = vector.load %arg4[%c0_6, %c0_7] : memref<32x32xbf16, #tpu.memory_space<vmem>>, vector<32x32xbf16>
    %cst_8 = arith.constant dense<0.000000e+00> : vector<8x32xf32>
    %10 = tpu.matmul %8, %9, %cst_8 {dimension_numbers = #tpu.dot_dimension_numbers<[1], [0], [0], [1], [0, 0, 1, 1], [], []>} : vector<8x32xbf16>, vector<32x32xbf16>, vector<8x32xf32> -> vector<8x32xf32>
    %c0_9 = arith.constant 0 : index
    %c0_10 = arith.constant 0 : index
    %11 = vector.load %arg5[%c0_9, %c0_10] : memref<1x32xf32, #tpu.memory_space<vmem>>, vector<1x32xf32>
    %12 = vector.broadcast %11 : vector<1x32xf32> to vector<8x32xf32>
    %13 = arith.addf %10, %12 : vector<8x32xf32>
    %cst_11 = arith.constant 0.000000e+00 : f32
    %14 = vector.broadcast %cst_11 : f32 to vector<8x32xf32>
    %15 = arith.maximumf %13, %14 : vector<8x32xf32>
    %16 = arith.truncf %15 : vector<8x32xf32> to vector<8x32xbf16>
    %c0_12 = arith.constant 0 : index
    %c0_13 = arith.constant 0 : index
    %17 = vector.load %arg6[%c0_12, %c0_13] : memref<32x128xbf16, #tpu.memory_space<vmem>>, vector<32x128xbf16>
    %cst_14 = arith.constant dense<0.000000e+00> : vector<8x128xf32>
    %18 = tpu.matmul %16, %17, %cst_14 {dimension_numbers = #tpu.dot_dimension_numbers<[1], [0], [0], [1], [0, 0, 1, 1], [], []>} : vector<8x32xbf16>, vector<32x128xbf16>, vector<8x128xf32> -> vector<8x128xf32>
    %c0_15 = arith.constant 0 : index
    %c0_16 = arith.constant 0 : index
    %19 = vector.load %arg7[%c0_15, %c0_16] : memref<1x128xf32, #tpu.memory_space<vmem>>, vector<1x128xf32>
    %20 = vector.broadcast %19 : vector<1x128xf32> to vector<8x128xf32>
    %21 = arith.addf %18, %20 : vector<8x128xf32>
    %22 = math.tanh %21 : vector<8x128xf32>
    %c0_17 = arith.constant 0 : index
    %c0_18 = arith.constant 0 : index
    %23 = vector.load %arg8[%c0_17, %c0_18] : memref<8x128xf32, #tpu.memory_space<vmem>>, vector<8x128xf32>
    tpu.vector_store %arg8[%c0_17, %c0_18], %22 {strides = array<i32>} : memref<8x128xf32, #tpu.memory_space<vmem>>, vector<8x128xf32>,
    return
  }
  func.func @transform_0(%arg0: i32) -> (i32, i32) {
    %c0_i32 = arith.constant 0 : i32
    %c0_i32_0 = arith.constant 0 : i32
    return %arg0, %c0_i32 : i32, i32
  }
  func.func @transform_1(%arg0: i32) -> (i32, i32) {
    %c0_i32 = arith.constant 0 : i32
    %c0_i32_0 = arith.constant 0 : i32
    %c0_i32_1 = arith.constant 0 : i32
    return %c0_i32, %c0_i32_0 : i32, i32
  }
  func.func @transform_2(%arg0: i32) -> (i32, i32) {
    %c0_i32 = arith.constant 0 : i32
    %c0_i32_0 = arith.constant 0 : i32
    %c0_i32_1 = arith.constant 0 : i32
    return %c0_i32, %c0_i32_0 : i32, i32
  }
  func.func @transform_3(%arg0: i32) -> (i32, i32) {
    %c0_i32 = arith.constant 0 : i32
    %c0_i32_0 = arith.constant 0 : i32
    %c0_i32_1 = arith.constant 0 : i32
    return %c0_i32, %c0_i32_0 : i32, i32
  }
  func.func @transform_4(%arg0: i32) -> (i32, i32) {
    %c0_i32 = arith.constant 0 : i32
    %c0_i32_0 = arith.constant 0 : i32
    %c0_i32_1 = arith.constant 0 : i32
    return %c0_i32, %c0_i32_0 : i32, i32
  }
  func.func @transform_5(%arg0: i32) -> (i32, i32) {
    %c0_i32 = arith.constant 0 : i32
    %c0_i32_0 = arith.constant 0 : i32
    %c0_i32_1 = arith.constant 0 : i32
    return %c0_i32, %c0_i32_0 : i32, i32
  }
  func.func @transform_6(%arg0: i32) -> (i32, i32) {
    %c0_i32 = arith.constant 0 : i32
    %c0_i32_0 = arith.constant 0 : i32
    %c0_i32_1 = arith.constant 0 : i32
    return %c0_i32, %c0_i32_0 : i32, i32
  }
  func.func @transform_7(%arg0: i32) -> (i32, i32) {
    %c0_i32 = arith.constant 0 : i32
    %c0_i32_0 = arith.constant 0 : i32
    return %arg0, %c0_i32 : i32, i32
  }
}

module attributes {stable_mosaic.version = 11 : i64} {
  func.func @mlp_kernel(%arg0: i32, %arg1: memref<8x16xbf16, #tpu.memory_space<vmem>>, %arg2: memref<16x32xbf16, #tpu.memory_space<vmem>>, %arg3: memref<1x32xf32, #tpu.memory_space<vmem>>, %arg4: memref<32x32xbf16, #tpu.memory_space<vmem>>, %arg5: memref<1x32xf32, #tpu.memory_space<vmem>>, %arg6: memref<32x128xbf16, #tpu.memory_space<vmem>>, %arg7: memref<1x128xf32, #tpu.memory_space<vmem>>, %arg8: memref<8x128xf32, #tpu.memory_space<vmem>>) attributes {dimension_semantics = [#tpu.dimension_semantics<parallel>], iteration_bounds = array<i64: 1>, scalar_prefetch = 0 : i64, scratch_operands = 0 : i64, tpu.core_type = #tpu.core_type<tc>, window_params = [{transform_indices = @transform_0, window_bounds = array<i64: 8, 16>}, {pipeline_mode = #tpu.pipeline_mode<synchronous>, transform_indices = @transform_1, window_bounds = array<i64: 16, 32>}, {pipeline_mode = #tpu.pipeline_mode<synchronous>, transform_indices = @transform_2, window_bounds = array<i64: 1, 32>}, {pipeline_mode = #tpu.pipeline_mode<synchronous>, transform_indices = @transform_3, window_bounds = array<i64: 32, 32>}, {pipeline_mode = #tpu.pipeline_mode<synchronous>, transform_indices = @transform_4, window_bounds = array<i64: 1, 32>}, {pipeline_mode = #tpu.pipeline_mode<synchronous>, transform_indices = @transform_5, window_bounds = array<i64: 32, 128>}, {pipeline_mode = #tpu.pipeline_mode<synchronous>, transform_indices = @transform_6, window_bounds = array<i64: 1, 128>}, {transform_indices = @transform_7, window_bounds = array<i64: 8, 128>}]} {
    %c0 = arith.constant 0 : index
    %c0_0 = arith.constant 0 : index
    %0 = vector.load %arg1[%c0, %c0_0] : memref<8x16xbf16, #tpu.memory_space<vmem>>, vector<8x16xbf16>
    %c0_1 = arith.constant 0 : index
    %c0_2 = arith.constant 0 : index
    %1 = vector.load %arg2[%c0_1, %c0_2] : memref<16x32xbf16, #tpu.memory_space<vmem>>, vector<16x32xbf16>
    %cst = arith.constant dense<0.000000e+00> : vector<8x32xf32>
    %2 = tpu.matmul %0, %1, %cst {dimension_numbers = #tpu.dot_dimension_numbers<[1], [0], [0], [1], [0, 0, 1, 1], [], []>} : vector<8x16xbf16>, vector<16x32xbf16>, vector<8x32xf32> -> vector<8x32xf32>
    %c0_3 = arith.constant 0 : index
    %c0_4 = arith.constant 0 : index
    %3 = vector.load %arg3[%c0_3, %c0_4] : memref<1x32xf32, #tpu.memory_space<vmem>>, vector<1x32xf32>
    %4 = vector.broadcast %3 : vector<1x32xf32> to vector<8x32xf32>
    %5 = arith.addf %2, %4 : vector<8x32xf32>
    %cst_5 = arith.constant 0.000000e+00 : f32
    %6 = vector.broadcast %cst_5 : f32 to vector<8x32xf32>
    %7 = arith.maximumf %5, %6 : vector<8x32xf32>
    %8 = arith.truncf %7 : vector<8x32xf32> to vector<8x32xbf16>
    %c0_6 = arith.constant 0 : index
    %c0_7 = arith.constant 0 : index
    %9 = vector.load %arg4[%c0_6, %c0_7] : memref<32x32xbf16, #tpu.memory_space<vmem>>, vector<32x32xbf16>
    %cst_8 = arith.constant dense<0.000000e+00> : vector<8x32xf32>
    %10 = tpu.matmul %8, %9, %cst_8 {dimension_numbers = #tpu.dot_dimension_numbers<[1], [0], [0], [1], [0, 0, 1, 1], [], []>} : vector<8x32xbf16>, vector<32x32xbf16>, vector<8x32xf32> -> vector<8x32xf32>
    %c0_9 = arith.constant 0 : index
    %c0_10 = arith.constant 0 : index
    %11 = vector.load %arg5[%c0_9, %c0_10] : memref<1x32xf32, #tpu.memory_space<vmem>>, vector<1x32xf32>
    %12 = vector.broadcast %11 : vector<1x32xf32> to vector<8x32xf32>
    %13 = arith.addf %10, %12 : vector<8x32xf32>
    %cst_11 = arith.constant 0.000000e+00 : f32
    %14 = vector.broadcast %cst_11 : f32 to vector<8x32xf32>
    %15 = arith.maximumf %13, %14 : vector<8x32xf32>
    %16 = arith.truncf %15 : vector<8x32xf32> to vector<8x32xbf16>
    %c0_12 = arith.constant 0 : index
    %c0_13 = arith.constant 0 : index
    %17 = vector.load %arg6[%c0_12, %c0_13] : memref<32x128xbf16, #tpu.memory_space<vmem>>, vector<32x128xbf16>
    %cst_14 = arith.constant dense<0.000000e+00> : vector<8x128xf32>
    %18 = tpu.matmul %16, %17, %cst_14 {dimension_numbers = #tpu.dot_dimension_numbers<[1], [0], [0], [1], [0, 0, 1, 1], [], []>} : vector<8x32xbf16>, vector<32x128xbf16>, vector<8x128xf32> -> vector<8x128xf32>
    %c0_15 = arith.constant 0 : index
    %c0_16 = arith.constant 0 : index
    %19 = vector.load %arg7[%c0_15, %c0_16] : memref<1x128xf32, #tpu.memory_space<vmem>>, vector<1x128xf32>
    %20 = vector.broadcast %19 : vector<1x128xf32> to vector<8x128xf32>
    %21 = arith.addf %18, %20 : vector<8x128xf32>
    %22 = math.tanh %21 : vector<8x128xf32>
    %c0_17 = arith.constant 0 : index
    %c0_18 = arith.constant 0 : index
    %23 = vector.load %arg8[%c0_17, %c0_18] : memref<8x128xf32, #tpu.memory_space<vmem>>, vector<8x128xf32>
    tpu.vector_store %arg8[%c0_17, %c0_18], %22 {strides = array<i32>} : memref<8x128xf32, #tpu.memory_space<vmem>>, vector<8x128xf32>,
    return
  }
  func.func @transform_0(%arg0: i32) -> (i32, i32) {
    %c0_i32 = arith.constant 0 : i32
    %c0_i32_0 = arith.constant 0 : i32
    return %arg0, %c0_i32 : i32, i32
  }
  func.func @transform_1(%arg0: i32) -> (i32, i32) {
    %c0_i32 = arith.constant 0 : i32
    %c0_i32_0 = arith.constant 0 : i32
    %c0_i32_1 = arith.constant 0 : i32
    return %c0_i32, %c0_i32_0 : i32, i32
  }
  func.func @transform_2(%arg0: i32) -> (i32, i32) {
    %c0_i32 = arith.constant 0 : i32
    %c0_i32_0 = arith.constant 0 : i32
    %c0_i32_1 = arith.constant 0 : i32
    return %c0_i32, %c0_i32_0 : i32, i32
  }
  func.func @transform_3(%arg0: i32) -> (i32, i32) {
    %c0_i32 = arith.constant 0 : i32
    %c0_i32_0 = arith.constant 0 : i32
    %c0_i32_1 = arith.constant 0 : i32
    return %c0_i32, %c0_i32_0 : i32, i32
  }
  func.func @transform_4(%arg0: i32) -> (i32, i32) {
    %c0_i32 = arith.constant 0 : i32
    %c0_i32_0 = arith.constant 0 : i32
    %c0_i32_1 = arith.constant 0 : i32
    return %c0_i32, %c0_i32_0 : i32, i32
  }
  func.func @transform_5(%arg0: i32) -> (i32, i32) {
    %c0_i32 = arith.constant 0 : i32
    %c0_i32_0 = arith.constant 0 : i32
    %c0_i32_1 = arith.constant 0 : i32
    return %c0_i32, %c0_i32_0 : i32, i32
  }
  func.func @transform_6(%arg0: i32) -> (i32, i32) {
    %c0_i32 = arith.constant 0 : i32
    %c0_i32_0 = arith.constant 0 : i32
    %c0_i32_1 = arith.constant 0 : i32
    return %c0_i32, %c0_i32_0 : i32, i32
  }
  func.func @transform_7(%arg0: i32) -> (i32, i32) {
    %c0_i32 = arith.constant 0 : i32
    %c0_i32_0 = arith.constant 0 : i32
    return %arg0, %c0_i32 : i32, i32
  }
}

</mosaic_0001>

<llo_original>
// kernel: tpu_custom_call.1
$region0: #{tpu_custom_call.1}
  #allocation0 [shape = 'u32[]', space=smem, size = 0x4, offset = 0x4, fixed_abs, tag = 'smem constant byte address 0x4 - core index']
  #allocation1 [shape = 'u32[144,128]{1,0:T(1,128)}', space=vmem, size = 0x12000, scoped, tag = 'internal scratch']
  %s0 = inlined_call_operand.hbm [shape: bf16[8,16], index: 0, kind: input, shape index: {}]
  %s1 = inlined_call_operand.hbm [shape: bf16[16,32], index: 1, kind: input, shape index: {}]
  %s2 = inlined_call_operand.vmem [shape: f32[1,32], index: 2, kind: input, shape index: {}]
  %s3 = inlined_call_operand.hbm [shape: bf16[32,32], index: 3, kind: input, shape index: {}]
  %s4 = inlined_call_operand.vmem [shape: f32[1,32], index: 4, kind: input, shape index: {}]
  %s5 = inlined_call_operand.hbm [shape: bf16[32,128], index: 5, kind: input, shape index: {}]
  %s6 = inlined_call_operand.vmem [shape: f32[1,128], index: 6, kind: input, shape index: {}]
  %s7 = inlined_call_operand.hbm [shape: f32[8,128], index: 7, kind: output, shape index: {}]
  %s8 = sld [smem:[#allocation0]]
  $region54: #{tpu_custom_call.1} parent=0
    _
  %s10 = ssub.s32 1, %s8
  %s11 = scalar_select 0, %s10, %s8
  $region1: #{tpu_custom_call.1} parent=0
    #allocation2 [shape = 'u8[2048]{0}', space=vmem, size = 0x800, scoped, tag = 'input window, operand 0, single buffered']
    #allocation3 [shape = 's32[1]{0}', space=sflag, size = 0x4, scoped, tag = 'scoped memory for tpu_custom_call.1']
    #allocation4 [shape = 's32[1]{0}', space=sflag, size = 0x4, scoped, tag = 'scoped memory for tpu_custom_call.1']
    #allocation5 [shape = 'u8[4096]{0}', space=vmem, size = 0x1000, scoped, tag = 'input window, operand 1, single buffered']
    #allocation6 [shape = 's32[1]{0}', space=sflag, size = 0x4, scoped, tag = 'scoped memory for tpu_custom_call.1']
    #allocation7 [shape = 'u8[8192]{0}', space=vmem, size = 0x2000, scoped, tag = 'input window, operand 3, single buffered']
    #allocation8 [shape = 'u8[8192]{0}', space=vmem, size = 0x2000, scoped, tag = 'input window, operand 5, single buffered']
    #allocation9 [shape = 's32[1]{0}', space=sflag, size = 0x4, scoped, tag = 'scoped memory for tpu_custom_call.1']
    #allocation10 [shape = 'u8[4096]{0}', space=vmem, size = 0x1000, scoped, tag = 'output window, operand 0, single buffered']
    %12 = vsyncpa [#allocation3], 0
    %13 = vsyncpa [#allocation6], 0
    %14 = vsyncpa [#allocation9], 0
    %15 = vsyncpa [#allocation4], 0
    // Predicated region
    $region2: #{tpu_custom_call.1} parent=1 // pred_check
      _
    $region3: #{tpu_custom_call.1} parent=1 // pred_check_branch
      %17 = sbr.rel (0) target = $region5
    $region4: #{tpu_custom_call.1} parent=1 // pred_region
      %s19 = ssub.s32 64, 64
      %20 = vsyncadd [#allocation3], %s19
      %s22 = sshll.u32 [#allocation2], 4
      %s23 = int_to_ptr.vmem [resolvable:$true] %s22
      %25 = dma.hbm_to_vmem [thread:$0]  %s0, 64, %s23, [#allocation3]
    $region5: #{tpu_custom_call.1} parent=1 // pred_fallthru
      _
    // Predicated region
    $region6: #{tpu_custom_call.1} parent=1 // pred_check
      _
    $region7: #{tpu_custom_call.1} parent=1 // pred_check_branch
      %27 = sbr.rel (0) target = $region9
    $region8: #{tpu_custom_call.1} parent=1 // pred_region
      %s29 = ssub.s32 128, 128
      %30 = vsyncadd [#allocation6], %s29
      %s31 = sshll.u32 [#allocation5], 4
      %s32 = int_to_ptr.vmem [resolvable:$true] %s31
      %37 = dma.hbm_to_vmem [thread:$0]  %s1, 128, %s32, [#allocation6], 64, 64, 4
    $region9: #{tpu_custom_call.1} parent=1 // pred_fallthru
      _
    // Predicated region
    $region10: #{tpu_custom_call.1} parent=1 // pred_check
      _
    $region11: #{tpu_custom_call.1} parent=1 // pred_check_branch
      %39 = sbr.rel (0) target = $region13
    $region12: #{tpu_custom_call.1} parent=1 // pred_region
      _
    $region13: #{tpu_custom_call.1} parent=1 // pred_fallthru
      _
    // Predicated region
    $region14: #{tpu_custom_call.1} parent=1 // pred_check
      _
    $region15: #{tpu_custom_call.1} parent=1 // pred_check_branch
      %41 = sbr.rel (0) target = $region17
    $region16: #{tpu_custom_call.1} parent=1 // pred_region
      %s43 = ssub.s32 256, 256
      %44 = vsyncadd [#allocation6], %s43
      %s45 = sshll.u32 [#allocation7], 4
      %s46 = int_to_ptr.vmem [resolvable:$true] %s45
      %51 = dma.hbm_to_vmem [thread:$0]  %s3, 256, %s46, [#allocation6], 64, 64, 4
    $region17: #{tpu_custom_call.1} parent=1 // pred_fallthru
      _
    // Predicated region
    $region18: #{tpu_custom_call.1} parent=1 // pred_check
      _
    $region19: #{tpu_custom_call.1} parent=1 // pred_check_branch
      %53 = sbr.rel (0) target = $region21
    $region20: #{tpu_custom_call.1} parent=1 // pred_region
      _
    $region21: #{tpu_custom_call.1} parent=1 // pred_fallthru
      _
    // Predicated region
    $region22: #{tpu_custom_call.1} parent=1 // pred_check
      _
    $region23: #{tpu_custom_call.1} parent=1 // pred_check_branch
      %55 = sbr.rel (0) target = $region25
    $region24: #{tpu_custom_call.1} parent=1 // pred_region
      %s57 = ssub.s32 256, 256
      %58 = vsyncadd [#allocation9], %s57
      %s59 = sshll.u32 [#allocation8], 4
      %s60 = int_to_ptr.vmem [resolvable:$true] %s59
      %65 = dma.hbm_to_vmem [thread:$0]  %s5, 256, %s60, [#allocation9], 64, 64, 4
    $region25: #{tpu_custom_call.1} parent=1 // pred_fallthru
      _
    // Predicated region
    $region26: #{tpu_custom_call.1} parent=1 // pred_check
      _
    $region27: #{tpu_custom_call.1} parent=1 // pred_check_branch
      %67 = sbr.rel (0) target = $region29
    $region28: #{tpu_custom_call.1} parent=1 // pred_region
      _
    $region29: #{tpu_custom_call.1} parent=1 // pred_fallthru
      _
    // Predicated region
    $region30: #{tpu_custom_call.1} parent=1 // pred_check
      _
    $region31: #{tpu_custom_call.1} parent=1 // pred_check_branch
      %69 = sbr.rel (0) target = $region33
    $region32: #{tpu_custom_call.1} parent=1 // pred_region
      %70 = dma.done [#allocation3], 64
    $region33: #{tpu_custom_call.1} parent=1 // pred_fallthru
      _
    // Predicated region
    $region34: #{tpu_custom_call.1} parent=1 // pred_check
      _
    $region35: #{tpu_custom_call.1} parent=1 // pred_check_branch
      %72 = sbr.rel (0) target = $region37
    $region36: #{tpu_custom_call.1} parent=1 // pred_region
      %73 = dma.done [#allocation6], 128
    $region37: #{tpu_custom_call.1} parent=1 // pred_fallthru
      _
    // Predicated region
    $region38: #{tpu_custom_call.1} parent=1 // pred_check
      _
    $region39: #{tpu_custom_call.1} parent=1 // pred_check_branch
      %75 = sbr.rel (0) target = $region41
    $region40: #{tpu_custom_call.1} parent=1 // pred_region
      %76 = dma.done [#allocation6], 256
    $region41: #{tpu_custom_call.1} parent=1 // pred_fallthru
      _
    // Predicated region
    $region42: #{tpu_custom_call.1} parent=1 // pred_check
      _
    $region43: #{tpu_custom_call.1} parent=1 // pred_check_branch
      %78 = sbr.rel (0) target = $region45
    $region44: #{tpu_custom_call.1} parent=1 // pred_region
      %79 = dma.done [#allocation9], 256
    $region45: #{tpu_custom_call.1} parent=1 // pred_fallthru
      _
    %v81 = vld [vmem:[#allocation2] sm:$0xf]
    %v82 = vld [vmem:[#allocation5] sm:$0xf]
    %v83 = vld [vmem:[#allocation5 + $0x4] sm:$0xf]
    %v84 = vld [vmem:[%s2] sm:$0x1]
    %v86 = vlaneseq
    %v87 = vshrl.u32 %v86, 7
    %v88 = vsub.s32 0, %v87
    %v89 = vrot.slane %v84, %v88
    %v93 = vunpack.c.l.b16 %v82
    %v94 = vunpack.c.l.b16 %v83
    %v95 = vpack.c.b16 %v94, %v93
    %vm97 = vcmask 130048
    %v99 = vsel %vm97, %v81, 0
    %101 = vmatprep.subr.bf16.mxu0 0
    %102 = vmatpush1.bf16.msra.mxu0 0
    %103 = vmatprep.subr.bf16.mxu0 0
    %104 = vmatpush1.bf16.msra.mxu0 0
    %105 = vmatprep.subr.bf16.mxu0 0
    %106 = vmatpush1.bf16.msra.mxu0 0
    %107 = vmatprep.subr.bf16.mxu0 0
    %108 = vmatpush1.bf16.msra.mxu0 0
    %109 = vmatprep.subr.bf16.mxu0 0
    %110 = vmatpush1.bf16.msra.mxu0 0
    %111 = vmatprep.subr.bf16.mxu0 0
    %112 = vmatpush1.bf16.msra.mxu0 0
    %113 = vmatprep.subr.bf16.mxu0 0
    %114 = vmatpush1.bf16.msra.mxu0 0
    %115 = vmatprep.subr.bf16.mxu0 0
    %116 = vmatpush1.bf16.msra.mxu0 %v95
    %117 = vmatprep.subr.bf16.mxu0 0
    %118 = vmatpush2.bf16.msra.mxu0 0
    %119 = vmatprep.subr.bf16.mxu0 0
    %120 = vmatpush2.bf16.msra.mxu0 0
    %121 = vmatprep.subr.bf16.mxu0 0
    %122 = vmatpush2.bf16.msra.mxu0 0
    %123 = vmatprep.subr.bf16.mxu0 0
    %124 = vmatpush2.bf16.msra.mxu0 0
    %125 = vmatprep.subr.bf16.mxu0 0
    %126 = vmatpush2.bf16.msra.mxu0 0
    %127 = vmatprep.subr.bf16.mxu0 0
    %128 = vmatpush2.bf16.msra.mxu0 0
    %129 = vmatprep.subr.bf16.mxu0 0
    %130 = vmatpush2.bf16.msra.mxu0 0
    %131 = vmatprep.subr.bf16.mxu0 0
    %132 = vmatpush2.bf16.msra.mxu0 0
    %133 = vmatprep.mubr.bf16.mxu0 0
    %134 = vmatmul.mubr.bf16.gmra.mxu0 %v99
    %v135 = vpop.f32.mrf.mxu0
    %v136 = vadd.f32 %v89, %v135
    %v137 = vpop.f32.mrf.mxu0
    %v138 = vpop.f32.mrf.mxu0
    %v139 = vpop.f32.mrf.mxu0
    %140 = vdwg.mxu0
    %v141 = vmax.f32 %v136, 0.0
    %v142 = vpack.c.bf16 %v141, %v141
    %v143 = vld [vmem:[#allocation7] sm:$0xf]
    %v144 = vld [vmem:[#allocation7 + $0x4] sm:$0xf]
    %v145 = vld [vmem:[#allocation7 + $0x8] sm:$0xf]
    %v146 = vld [vmem:[#allocation7 + $0xc] sm:$0xf]
    %v147 = vld [vmem:[%s4] sm:$0x1]
    %v149 = vlaneseq
    %v150 = vshrl.u32 %v149, 7
    %v151 = vsub.s32 0, %v150
    %v152 = vrot.slane %v147, %v151
    %v158 = vunpack.c.l.b16 %v143
    %v159 = vunpack.c.l.b16 %v144
    %v160 = vunpack.c.l.b16 %v145
    %v161 = vunpack.c.l.b16 %v146
    %v162 = vpack.c.b16 %v159, %v158
    %v163 = vpack.c.b16 %v161, %v160
    %vm166 = vcmask 261120
    %v168 = vsel %vm166, %v142, 0
    %170 = vmatprep.subr.bf16.mxu0 0
    %171 = vmatpush1.bf16.msra.mxu0 0
    %172 = vmatprep.subr.bf16.mxu0 0
    %173 = vmatpush1.bf16.msra.mxu0 0
    %174 = vmatprep.subr.bf16.mxu0 0
    %175 = vmatpush1.bf16.msra.mxu0 0
    %176 = vmatprep.subr.bf16.mxu0 0
    %177 = vmatpush1.bf16.msra.mxu0 0
    %178 = vmatprep.subr.bf16.mxu0 0
    %179 = vmatpush1.bf16.msra.mxu0 0
    %180 = vmatprep.subr.bf16.mxu0 0
    %181 = vmatpush1.bf16.msra.mxu0 0
    %182 = vmatprep.subr.bf16.mxu0 0
    %183 = vmatpush1.bf16.msra.mxu0 %v163
    %184 = vmatprep.subr.bf16.mxu0 0
    %185 = vmatpush1.bf16.msra.mxu0 %v162
    %186 = vmatprep.subr.bf16.mxu0 0
    %187 = vmatpush2.bf16.msra.mxu0 0
    %188 = vmatprep.subr.bf16.mxu0 0
    %189 = vmatpush2.bf16.msra.mxu0 0
    %190 = vmatprep.subr.bf16.mxu0 0
    %191 = vmatpush2.bf16.msra.mxu0 0
    %192 = vmatprep.subr.bf16.mxu0 0
    %193 = vmatpush2.bf16.msra.mxu0 0
    %194 = vmatprep.subr.bf16.mxu0 0
    %195 = vmatpush2.bf16.msra.mxu0 0
    %196 = vmatprep.subr.bf16.mxu0 0
    %197 = vmatpush2.bf16.msra.mxu0 0
    %198 = vmatprep.subr.bf16.mxu0 0
    %199 = vmatpush2.bf16.msra.mxu0 0
    %200 = vmatprep.subr.bf16.mxu0 0
    %201 = vmatpush2.bf16.msra.mxu0 0
    %202 = vmatprep.mubr.bf16.mxu0 0
    %203 = vmatmul.mubr.bf16.gmra.mxu0 %v168
    %v204 = vpop.f32.mrf.mxu0
    %v205 = vadd.f32 %v152, %v204
    %v206 = vpop.f32.mrf.mxu0
    %v207 = vpop.f32.mrf.mxu0
    %v208 = vpop.f32.mrf.mxu0
    %209 = vdwg.mxu0
    %v210 = vmax.f32 %v205, 0.0
    %v211 = vpack.c.bf16 %v210, %v210
    %v212 = vld [vmem:[#allocation8] sm:$0xf]
    %v213 = vld [vmem:[#allocation8 + $0x4] sm:$0xf]
    %v214 = vld [vmem:[#allocation8 + $0x8] sm:$0xf]
    %v215 = vld [vmem:[#allocation8 + $0xc] sm:$0xf]
    %v216 = vld [vmem:[%s6] sm:$0x1]
    %v218 = vlaneseq
    %v219 = vshrl.u32 %v218, 7
    %v220 = vsub.s32 0, %v219
    %v221 = vrot.slane %v216, %v220
    %v227 = vunpack.c.l.b16 %v212
    %v228 = vunpack.c.l.b16 %v213
    %v229 = vunpack.c.l.b16 %v214
    %v230 = vunpack.c.l.b16 %v215
    %v231 = vpack.c.b16 %v228, %v227
    %v232 = vpack.c.b16 %v230, %v229
    %v236 = vsel %vm166, %v211, 0
    %238 = vmatprep.subr.bf16.mxu0 0
    %239 = vmatpush1.bf16.msra.mxu0 0
    %240 = vmatprep.subr.bf16.mxu0 0
    %241 = vmatpush1.bf16.msra.mxu0 0
    %242 = vmatprep.subr.bf16.mxu0 0
    %243 = vmatpush1.bf16.msra.mxu0 0
    %244 = vmatprep.subr.bf16.mxu0 0
    %245 = vmatpush1.bf16.msra.mxu0 0
    %246 = vmatprep.subr.bf16.mxu0 0
    %247 = vmatpush1.bf16.msra.mxu0 0
    %248 = vmatprep.subr.bf16.mxu0 0
    %249 = vmatpush1.bf16.msra.mxu0 0
    %250 = vmatprep.subr.bf16.mxu0 0
    %251 = vmatpush1.bf16.msra.mxu0 %v232
    %252 = vmatprep.subr.bf16.mxu0 0
    %253 = vmatpush1.bf16.msra.mxu0 %v231
    %254 = vmatprep.subr.bf16.mxu0 0
    %255 = vmatpush2.bf16.msra.mxu0 0
    %256 = vmatprep.subr.bf16.mxu0 0
    %257 = vmatpush2.bf16.msra.mxu0 0
    %258 = vmatprep.subr.bf16.mxu0 0
    %259 = vmatpush2.bf16.msra.mxu0 0
    %260 = vmatprep.subr.bf16.mxu0 0
    %261 = vmatpush2.bf16.msra.mxu0 0
    %262 = vmatprep.subr.bf16.mxu0 0
    %263 = vmatpush2.bf16.msra.mxu0 0
    %264 = vmatprep.subr.bf16.mxu0 0
    %265 = vmatpush2.bf16.msra.mxu0 0
    %266 = vmatprep.subr.bf16.mxu0 0
    %267 = vmatpush2.bf16.msra.mxu0 0
    %268 = vmatprep.subr.bf16.mxu0 0
    %269 = vmatpush2.bf16.msra.mxu0 0
    %270 = vmatprep.mubr.bf16.mxu0 0
    %271 = vmatmul.mubr.bf16.gmra.mxu0 %v236
    %v272 = vpop.f32.mrf.mxu0
    %v273 = vadd.f32 %v221, %v272
    %v274 = vpop.f32.mrf.mxu0
    %v275 = vpop.f32.mrf.mxu0
    %v276 = vpop.f32.mrf.mxu0
    %277 = vdwg.mxu0
    %v278 = vtanh.pop %v273
    %279 = vst [vmem:[#allocation10] sm:$0xff] %v278
    // Predicated region
    $region46: #{tpu_custom_call.1} parent=1 // pred_check
      _
    $region47: #{tpu_custom_call.1} parent=1 // pred_check_branch
      %281 = sbr.rel (0) target = $region49
    $region48: #{tpu_custom_call.1} parent=1 // pred_region
      %s283 = ssub.s32 128, 128
      %284 = vsyncadd [#allocation4], %s283
      %s286 = sshll.u32 [#allocation10], 4
      %s287 = int_to_ptr.vmem [resolvable:$true] %s286
      %289 = dma.vmem_to_hbm [thread:$0]  %s287, 128, %s7, [#allocation4]
    $region49: #{tpu_custom_call.1} parent=1 // pred_fallthru
      _
    // Predicated region
    $region50: #{tpu_custom_call.1} parent=1 // pred_check
      _
    $region51: #{tpu_custom_call.1} parent=1 // pred_check_branch
      %291 = sbr.rel (0) target = $region53
    $region52: #{tpu_custom_call.1} parent=1 // pred_region
      %292 = dma.done [#allocation4], 128
    $region53: #{tpu_custom_call.1} parent=1 // pred_fallthru
      _
    %293 = vsyncpa [#allocation3], 1
    %294 = vsyncpa [#allocation6], 1
    %295 = vsyncpa [#allocation9], 1
    %296 = vsyncpa [#allocation4], 1

// kernel: tpu_custom_call.1
$region0: #{tpu_custom_call.1}
  #allocation0 [shape = 'u32[]', space=smem, size = 0x4, offset = 0x4, fixed_abs, tag = 'smem constant byte address 0x4 - core index']
  #allocation1 [shape = 'u32[144,128]{1,0:T(1,128)}', space=vmem, size = 0x12000, scoped, tag = 'internal scratch']
  %s0 = inlined_call_operand.hbm [shape: bf16[8,16], index: 0, kind: input, shape index: {}]
  %s1 = inlined_call_operand.hbm [shape: bf16[16,32], index: 1, kind: input, shape index: {}]
  %s2 = inlined_call_operand.vmem [shape: f32[1,32], index: 2, kind: input, shape index: {}]
  %s3 = inlined_call_operand.hbm [shape: bf16[32,32], index: 3, kind: input, shape index: {}]
  %s4 = inlined_call_operand.vmem [shape: f32[1,32], index: 4, kind: input, shape index: {}]
  %s5 = inlined_call_operand.hbm [shape: bf16[32,128], index: 5, kind: input, shape index: {}]
  %s6 = inlined_call_operand.vmem [shape: f32[1,128], index: 6, kind: input, shape index: {}]
  %s7 = inlined_call_operand.hbm [shape: f32[8,128], index: 7, kind: output, shape index: {}]
  %s8 = sld [smem:[#allocation0]]
  $region54: #{tpu_custom_call.1} parent=0
    _
  %s10 = ssub.s32 1, %s8
  %s11 = scalar_select 0, %s10, %s8
  $region1: #{tpu_custom_call.1} parent=0
    #allocation2 [shape = 'u8[2048]{0}', space=vmem, size = 0x800, scoped, tag = 'input window, operand 0, single buffered']
    #allocation3 [shape = 's32[1]{0}', space=sflag, size = 0x4, scoped, tag = 'scoped memory for tpu_custom_call.1']
    #allocation4 [shape = 's32[1]{0}', space=sflag, size = 0x4, scoped, tag = 'scoped memory for tpu_custom_call.1']
    #allocation5 [shape = 'u8[4096]{0}', space=vmem, size = 0x1000, scoped, tag = 'input window, operand 1, single buffered']
    #allocation6 [shape = 's32[1]{0}', space=sflag, size = 0x4, scoped, tag = 'scoped memory for tpu_custom_call.1']
    #allocation7 [shape = 'u8[8192]{0}', space=vmem, size = 0x2000, scoped, tag = 'input window, operand 3, single buffered']
    #allocation8 [shape = 'u8[8192]{0}', space=vmem, size = 0x2000, scoped, tag = 'input window, operand 5, single buffered']
    #allocation9 [shape = 's32[1]{0}', space=sflag, size = 0x4, scoped, tag = 'scoped memory for tpu_custom_call.1']
    #allocation10 [shape = 'u8[4096]{0}', space=vmem, size = 0x1000, scoped, tag = 'output window, operand 0, single buffered']
    %12 = vsyncpa [#allocation3], 0
    %13 = vsyncpa [#allocation6], 0
    %14 = vsyncpa [#allocation9], 0
    %15 = vsyncpa [#allocation4], 0
    // Predicated region
    $region2: #{tpu_custom_call.1} parent=1 // pred_check
      _
    $region3: #{tpu_custom_call.1} parent=1 // pred_check_branch
      %17 = sbr.rel (0) target = $region5
    $region4: #{tpu_custom_call.1} parent=1 // pred_region
      %s19 = ssub.s32 64, 64
      %20 = vsyncadd [#allocation3], %s19
      %s22 = sshll.u32 [#allocation2], 4
      %s23 = int_to_ptr.vmem [resolvable:$true] %s22
      %25 = dma.hbm_to_vmem [thread:$0]  %s0, 64, %s23, [#allocation3]
    $region5: #{tpu_custom_call.1} parent=1 // pred_fallthru
      _
    // Predicated region
    $region6: #{tpu_custom_call.1} parent=1 // pred_check
      _
    $region7: #{tpu_custom_call.1} parent=1 // pred_check_branch
      %27 = sbr.rel (0) target = $region9
    $region8: #{tpu_custom_call.1} parent=1 // pred_region
      %s29 = ssub.s32 128, 128
      %30 = vsyncadd [#allocation6], %s29
      %s31 = sshll.u32 [#allocation5], 4
      %s32 = int_to_ptr.vmem [resolvable:$true] %s31
      %37 = dma.hbm_to_vmem [thread:$0]  %s1, 128, %s32, [#allocation6], 64, 64, 4
    $region9: #{tpu_custom_call.1} parent=1 // pred_fallthru
      _
    // Predicated region
    $region10: #{tpu_custom_call.1} parent=1 // pred_check
      _
    $region11: #{tpu_custom_call.1} parent=1 // pred_check_branch
      %39 = sbr.rel (0) target = $region13
    $region12: #{tpu_custom_call.1} parent=1 // pred_region
      _
    $region13: #{tpu_custom_call.1} parent=1 // pred_fallthru
      _
    // Predicated region
    $region14: #{tpu_custom_call.1} parent=1 // pred_check
      _
    $region15: #{tpu_custom_call.1} parent=1 // pred_check_branch
      %41 = sbr.rel (0) target = $region17
    $region16: #{tpu_custom_call.1} parent=1 // pred_region
      %s43 = ssub.s32 256, 256
      %44 = vsyncadd [#allocation6], %s43
      %s45 = sshll.u32 [#allocation7], 4
      %s46 = int_to_ptr.vmem [resolvable:$true] %s45
      %51 = dma.hbm_to_vmem [thread:$0]  %s3, 256, %s46, [#allocation6], 64, 64, 4
    $region17: #{tpu_custom_call.1} parent=1 // pred_fallthru
      _
    // Predicated region
    $region18: #{tpu_custom_call.1} parent=1 // pred_check
      _
    $region19: #{tpu_custom_call.1} parent=1 // pred_check_branch
      %53 = sbr.rel (0) target = $region21
    $region20: #{tpu_custom_call.1} parent=1 // pred_region
      _
    $region21: #{tpu_custom_call.1} parent=1 // pred_fallthru
      _
    // Predicated region
    $region22: #{tpu_custom_call.1} parent=1 // pred_check
      _
    $region23: #{tpu_custom_call.1} parent=1 // pred_check_branch
      %55 = sbr.rel (0) target = $region25
    $region24: #{tpu_custom_call.1} parent=1 // pred_region
      %s57 = ssub.s32 256, 256
      %58 = vsyncadd [#allocation9], %s57
      %s59 = sshll.u32 [#allocation8], 4
      %s60 = int_to_ptr.vmem [resolvable:$true] %s59
      %65 = dma.hbm_to_vmem [thread:$0]  %s5, 256, %s60, [#allocation9], 64, 64, 4
    $region25: #{tpu_custom_call.1} parent=1 // pred_fallthru
      _
    // Predicated region
    $region26: #{tpu_custom_call.1} parent=1 // pred_check
      _
    $region27: #{tpu_custom_call.1} parent=1 // pred_check_branch
      %67 = sbr.rel (0) target = $region29
    $region28: #{tpu_custom_call.1} parent=1 // pred_region
      _
    $region29: #{tpu_custom_call.1} parent=1 // pred_fallthru
      _
    // Predicated region
    $region30: #{tpu_custom_call.1} parent=1 // pred_check
      _
    $region31: #{tpu_custom_call.1} parent=1 // pred_check_branch
      %69 = sbr.rel (0) target = $region33
    $region32: #{tpu_custom_call.1} parent=1 // pred_region
      %70 = dma.done [#allocation3], 64
    $region33: #{tpu_custom_call.1} parent=1 // pred_fallthru
      _
    // Predicated region
    $region34: #{tpu_custom_call.1} parent=1 // pred_check
      _
    $region35: #{tpu_custom_call.1} parent=1 // pred_check_branch
      %72 = sbr.rel (0) target = $region37
    $region36: #{tpu_custom_call.1} parent=1 // pred_region
      %73 = dma.done [#allocation6], 128
    $region37: #{tpu_custom_call.1} parent=1 // pred_fallthru
      _
    // Predicated region
    $region38: #{tpu_custom_call.1} parent=1 // pred_check
      _
    $region39: #{tpu_custom_call.1} parent=1 // pred_check_branch
      %75 = sbr.rel (0) target = $region41
    $region40: #{tpu_custom_call.1} parent=1 // pred_region
      %76 = dma.done [#allocation6], 256
    $region41: #{tpu_custom_call.1} parent=1 // pred_fallthru
      _
    // Predicated region
    $region42: #{tpu_custom_call.1} parent=1 // pred_check
      _
    $region43: #{tpu_custom_call.1} parent=1 // pred_check_branch
      %78 = sbr.rel (0) target = $region45
    $region44: #{tpu_custom_call.1} parent=1 // pred_region
      %79 = dma.done [#allocation9], 256
    $region45: #{tpu_custom_call.1} parent=1 // pred_fallthru
      _
    %v81 = vld [vmem:[#allocation2] sm:$0xf]
    %v82 = vld [vmem:[#allocation5] sm:$0xf]
    %v83 = vld [vmem:[#allocation5 + $0x4] sm:$0xf]
    %v84 = vld [vmem:[%s2] sm:$0x1]
    %v86 = vlaneseq
    %v87 = vshrl.u32 %v86, 7
    %v88 = vsub.s32 0, %v87
    %v89 = vrot.slane %v84, %v88
    %v93 = vunpack.c.l.b16 %v82
    %v94 = vunpack.c.l.b16 %v83
    %v95 = vpack.c.b16 %v94, %v93
    %vm97 = vcmask 130048
    %v99 = vsel %vm97, %v81, 0
    %101 = vmatprep.subr.bf16.mxu0 0
    %102 = vmatpush1.bf16.msra.mxu0 0
    %103 = vmatprep.subr.bf16.mxu0 0
    %104 = vmatpush1.bf16.msra.mxu0 0
    %105 = vmatprep.subr.bf16.mxu0 0
    %106 = vmatpush1.bf16.msra.mxu0 0
    %107 = vmatprep.subr.bf16.mxu0 0
    %108 = vmatpush1.bf16.msra.mxu0 0
    %109 = vmatprep.subr.bf16.mxu0 0
    %110 = vmatpush1.bf16.msra.mxu0 0
    %111 = vmatprep.subr.bf16.mxu0 0
    %112 = vmatpush1.bf16.msra.mxu0 0
    %113 = vmatprep.subr.bf16.mxu0 0
    %114 = vmatpush1.bf16.msra.mxu0 0
    %115 = vmatprep.subr.bf16.mxu0 0
    %116 = vmatpush1.bf16.msra.mxu0 %v95
    %117 = vmatprep.subr.bf16.mxu0 0
    %118 = vmatpush2.bf16.msra.mxu0 0
    %119 = vmatprep.subr.bf16.mxu0 0
    %120 = vmatpush2.bf16.msra.mxu0 0
    %121 = vmatprep.subr.bf16.mxu0 0
    %122 = vmatpush2.bf16.msra.mxu0 0
    %123 = vmatprep.subr.bf16.mxu0 0
    %124 = vmatpush2.bf16.msra.mxu0 0
    %125 = vmatprep.subr.bf16.mxu0 0
    %126 = vmatpush2.bf16.msra.mxu0 0
    %127 = vmatprep.subr.bf16.mxu0 0
    %128 = vmatpush2.bf16.msra.mxu0 0
    %129 = vmatprep.subr.bf16.mxu0 0
    %130 = vmatpush2.bf16.msra.mxu0 0
    %131 = vmatprep.subr.bf16.mxu0 0
    %132 = vmatpush2.bf16.msra.mxu0 0
    %133 = vmatprep.mubr.bf16.mxu0 0
    %134 = vmatmul.mubr.bf16.gmra.mxu0 %v99
    %v135 = vpop.f32.mrf.mxu0
    %v136 = vadd.f32 %v89, %v135
    %v137 = vpop.f32.mrf.mxu0
    %v138 = vpop.f32.mrf.mxu0
    %v139 = vpop.f32.mrf.mxu0
    %140 = vdwg.mxu0
    %v141 = vmax.f32 %v136, 0.0
    %v142 = vpack.c.bf16 %v141, %v141
    %v143 = vld [vmem:[#allocation7] sm:$0xf]
    %v144 = vld [vmem:[#allocation7 + $0x4] sm:$0xf]
    %v145 = vld [vmem:[#allocation7 + $0x8] sm:$0xf]
    %v146 = vld [vmem:[#allocation7 + $0xc] sm:$0xf]
    %v147 = vld [vmem:[%s4] sm:$0x1]
    %v149 = vlaneseq
    %v150 = vshrl.u32 %v149, 7
    %v151 = vsub.s32 0, %v150
    %v152 = vrot.slane %v147, %v151
    %v158 = vunpack.c.l.b16 %v143
    %v159 = vunpack.c.l.b16 %v144
    %v160 = vunpack.c.l.b16 %v145
    %v161 = vunpack.c.l.b16 %v146
    %v162 = vpack.c.b16 %v159, %v158
    %v163 = vpack.c.b16 %v161, %v160
    %vm166 = vcmask 261120
    %v168 = vsel %vm166, %v142, 0
    %170 = vmatprep.subr.bf16.mxu0 0
    %171 = vmatpush1.bf16.msra.mxu0 0
    %172 = vmatprep.subr.bf16.mxu0 0
    %173 = vmatpush1.bf16.msra.mxu0 0
    %174 = vmatprep.subr.bf16.mxu0 0
    %175 = vmatpush1.bf16.msra.mxu0 0
    %176 = vmatprep.subr.bf16.mxu0 0
    %177 = vmatpush1.bf16.msra.mxu0 0
    %178 = vmatprep.subr.bf16.mxu0 0
    %179 = vmatpush1.bf16.msra.mxu0 0
    %180 = vmatprep.subr.bf16.mxu0 0
    %181 = vmatpush1.bf16.msra.mxu0 0
    %182 = vmatprep.subr.bf16.mxu0 0
    %183 = vmatpush1.bf16.msra.mxu0 %v163
    %184 = vmatprep.subr.bf16.mxu0 0
    %185 = vmatpush1.bf16.msra.mxu0 %v162
    %186 = vmatprep.subr.bf16.mxu0 0
    %187 = vmatpush2.bf16.msra.mxu0 0
    %188 = vmatprep.subr.bf16.mxu0 0
    %189 = vmatpush2.bf16.msra.mxu0 0
    %190 = vmatprep.subr.bf16.mxu0 0
    %191 = vmatpush2.bf16.msra.mxu0 0
    %192 = vmatprep.subr.bf16.mxu0 0
    %193 = vmatpush2.bf16.msra.mxu0 0
    %194 = vmatprep.subr.bf16.mxu0 0
    %195 = vmatpush2.bf16.msra.mxu0 0
    %196 = vmatprep.subr.bf16.mxu0 0
    %197 = vmatpush2.bf16.msra.mxu0 0
    %198 = vmatprep.subr.bf16.mxu0 0
    %199 = vmatpush2.bf16.msra.mxu0 0
    %200 = vmatprep.subr.bf16.mxu0 0
    %201 = vmatpush2.bf16.msra.mxu0 0
    %202 = vmatprep.mubr.bf16.mxu0 0
    %203 = vmatmul.mubr.bf16.gmra.mxu0 %v168
    %v204 = vpop.f32.mrf.mxu0
    %v205 = vadd.f32 %v152, %v204
    %v206 = vpop.f32.mrf.mxu0
    %v207 = vpop.f32.mrf.mxu0
    %v208 = vpop.f32.mrf.mxu0
    %209 = vdwg.mxu0
    %v210 = vmax.f32 %v205, 0.0
    %v211 = vpack.c.bf16 %v210, %v210
    %v212 = vld [vmem:[#allocation8] sm:$0xf]
    %v213 = vld [vmem:[#allocation8 + $0x4] sm:$0xf]
    %v214 = vld [vmem:[#allocation8 + $0x8] sm:$0xf]
    %v215 = vld [vmem:[#allocation8 + $0xc] sm:$0xf]
    %v216 = vld [vmem:[%s6] sm:$0x1]
    %v218 = vlaneseq
    %v219 = vshrl.u32 %v218, 7
    %v220 = vsub.s32 0, %v219
    %v221 = vrot.slane %v216, %v220
    %v227 = vunpack.c.l.b16 %v212
    %v228 = vunpack.c.l.b16 %v213
    %v229 = vunpack.c.l.b16 %v214
    %v230 = vunpack.c.l.b16 %v215
    %v231 = vpack.c.b16 %v228, %v227
    %v232 = vpack.c.b16 %v230, %v229
    %v236 = vsel %vm166, %v211, 0
    %238 = vmatprep.subr.bf16.mxu0 0
    %239 = vmatpush1.bf16.msra.mxu0 0
    %240 = vmatprep.subr.bf16.mxu0 0
    %241 = vmatpush1.bf16.msra.mxu0 0
    %242 = vmatprep.subr.bf16.mxu0 0
    %243 = vmatpush1.bf16.msra.mxu0 0
    %244 = vmatprep.subr.bf16.mxu0 0
    %245 = vmatpush1.bf16.msra.mxu0 0
    %246 = vmatprep.subr.bf16.mxu0 0
    %247 = vmatpush1.bf16.msra.mxu0 0
    %248 = vmatprep.subr.bf16.mxu0 0
    %249 = vmatpush1.bf16.msra.mxu0 0
    %250 = vmatprep.subr.bf16.mxu0 0
    %251 = vmatpush1.bf16.msra.mxu0 %v232
    %252 = vmatprep.subr.bf16.mxu0 0
    %253 = vmatpush1.bf16.msra.mxu0 %v231
    %254 = vmatprep.subr.bf16.mxu0 0
    %255 = vmatpush2.bf16.msra.mxu0 0
    %256 = vmatprep.subr.bf16.mxu0 0
    %257 = vmatpush2.bf16.msra.mxu0 0
    %258 = vmatprep.subr.bf16.mxu0 0
    %259 = vmatpush2.bf16.msra.mxu0 0
    %260 = vmatprep.subr.bf16.mxu0 0
    %261 = vmatpush2.bf16.msra.mxu0 0
    %262 = vmatprep.subr.bf16.mxu0 0
    %263 = vmatpush2.bf16.msra.mxu0 0
    %264 = vmatprep.subr.bf16.mxu0 0
    %265 = vmatpush2.bf16.msra.mxu0 0
    %266 = vmatprep.subr.bf16.mxu0 0
    %267 = vmatpush2.bf16.msra.mxu0 0
    %268 = vmatprep.subr.bf16.mxu0 0
    %269 = vmatpush2.bf16.msra.mxu0 0
    %270 = vmatprep.mubr.bf16.mxu0 0
    %271 = vmatmul.mubr.bf16.gmra.mxu0 %v236
    %v272 = vpop.f32.mrf.mxu0
    %v273 = vadd.f32 %v221, %v272
    %v274 = vpop.f32.mrf.mxu0
    %v275 = vpop.f32.mrf.mxu0
    %v276 = vpop.f32.mrf.mxu0
    %277 = vdwg.mxu0
    %v278 = vtanh.pop %v273
    %279 = vst [vmem:[#allocation10] sm:$0xff] %v278
    // Predicated region
    $region46: #{tpu_custom_call.1} parent=1 // pred_check
      _
    $region47: #{tpu_custom_call.1} parent=1 // pred_check_branch
      %281 = sbr.rel (0) target = $region49
    $region48: #{tpu_custom_call.1} parent=1 // pred_region
      %s283 = ssub.s32 128, 128
      %284 = vsyncadd [#allocation4], %s283
      %s286 = sshll.u32 [#allocation10], 4
      %s287 = int_to_ptr.vmem [resolvable:$true] %s286
      %289 = dma.vmem_to_hbm [thread:$0]  %s287, 128, %s7, [#allocation4]
    $region49: #{tpu_custom_call.1} parent=1 // pred_fallthru
      _
    // Predicated region
    $region50: #{tpu_custom_call.1} parent=1 // pred_check
      _
    $region51: #{tpu_custom_call.1} parent=1 // pred_check_branch
      %291 = sbr.rel (0) target = $region53
    $region52: #{tpu_custom_call.1} parent=1 // pred_region
      %292 = dma.done [#allocation4], 128
    $region53: #{tpu_custom_call.1} parent=1 // pred_fallthru
      _
    %293 = vsyncpa [#allocation3], 1
    %294 = vsyncpa [#allocation6], 1
    %295 = vsyncpa [#allocation9], 1
    %296 = vsyncpa [#allocation4], 1

</llo_original>
